<compile_context>
chip_gen: v7x
topology: tpu7x:2x2x1
jax: 0.10.0
libtpu: 0.0.40
codegen_flags: <defaults>
</compile_context>

<pallas_src>
import functools

import jax
import jax.numpy as jnp
from jax.experimental import pallas as pl
from jax.experimental.pallas import tpu as pltpu

EPS = 1e-5


def _round_up(n, m):
    return ((n + m - 1) // m) * m


# ---------------------------------------------------------------------------
# In-kernel math (shared by single-step and scan kernels)
# ---------------------------------------------------------------------------

def _ln_tanh(z, gamma, beta, h_true):
    """LayerNorm over the true hidden width + affine + tanh (mask-free).

    Relies on padded columns of z being exactly zero (the weight matrices
    were zero-padded), so full-width sums equal true-width sums. Using
    var = E[z^2] - mean^2 avoids any per-step iota/compare/select on the VPU.
    Padded output columns become nonzero, which is harmless: the wrapper
    slices them off and the padded rows of whT are zero, so the recurrence
    is unaffected.
    """
    inv_h = 1.0 / float(h_true)
    mean = jnp.sum(z, axis=-1, keepdims=True) * inv_h
    ex2 = jnp.sum(z * z, axis=-1, keepdims=True) * inv_h
    var = jnp.maximum(ex2 - mean * mean, 0.0)
    z_hat = (z - mean) * jax.lax.rsqrt(var + EPS)
    return jnp.tanh(z_hat * gamma + beta)


def _cell_kernel(x_ref, h_ref, wxT_ref, whT_ref, gamma_ref, beta_ref,
                 out_ref, *, h_true):
    # Two bf16 MXU matmuls accumulating into one f32 result.
    z = jnp.dot(x_ref[...], wxT_ref[...], preferred_element_type=jnp.float32)
    z = z + jnp.dot(h_ref[...], whT_ref[...], preferred_element_type=jnp.float32)
    out_ref[...] = _ln_tanh(z, gamma_ref[...], beta_ref[...], h_true)


def _scan_kernel(xs_ref, h0_ref, wxT_ref, whT_ref, gamma_ref, beta_ref,
                 out_ref, h_vmem, *, h_true, tc):
    t = pl.program_id(1)  # time-chunk index (sequential axis)

    @pl.when(t == 0)
    def _():
        h_vmem[...] = h0_ref[...]        # bf16 -> bf16, per batch tile

    gamma = gamma_ref[...]               # hoisted: 1 vreg each, reused TC times
    beta = beta_ref[...]

    def step(i, h_carry):
        # h_carry is bf16, lives in vregs across the unrolled chunk.
        z = jnp.dot(xs_ref[i], wxT_ref[...],
                    preferred_element_type=jnp.float32)
        z = z + jnp.dot(h_carry, whT_ref[...],
                        preferred_element_type=jnp.float32)
        h_new = _ln_tanh(z, gamma, beta, h_true)
        out_ref[i] = h_new               # lane-dense f32 store of this step
        return h_new.astype(h_vmem.dtype)

    h_vmem[...] = jax.lax.fori_loop(0, tc, step, h_vmem[...], unroll=True)


# ---------------------------------------------------------------------------
# Parameter preparation (done ONCE, not per forward call)
# ---------------------------------------------------------------------------

def prepare_params(weight, gamma, beta, input_size, hidden_size):
    """Split / transpose / zero-pad the nn.Linear weight and LayerNorm params."""
    assert weight.shape == (hidden_size, input_size + hidden_size)
    kx_pad = _round_up(input_size, 128)
    h_pad = _round_up(hidden_size, 128)   # also the contraction pad for Wh

    wx = weight[:, :input_size]            # (H, Ix)
    wh = weight[:, input_size:]            # (H, H)
    wxT = jnp.zeros((kx_pad, h_pad), jnp.float32)
    wxT = wxT.at[:input_size, :hidden_size].set(wx.T.astype(jnp.float32))
    whT = jnp.zeros((h_pad, h_pad), jnp.float32)
    whT = whT.at[:hidden_size, :hidden_size].set(wh.T.astype(jnp.float32))

    gamma_p = jnp.ones((1, h_pad), jnp.float32)
    gamma_p = gamma_p.at[0, :hidden_size].set(gamma.astype(jnp.float32))
    beta_p = jnp.zeros((1, h_pad), jnp.float32)
    beta_p = beta_p.at[0, :hidden_size].set(beta.astype(jnp.float32))

    return dict(
        wxT=wxT.astype(jnp.bfloat16),   # MXU operands in bf16
        whT=whT.astype(jnp.bfloat16),
        gamma=gamma_p, beta=beta_p,     # LN params stay f32
        input_size=input_size, hidden_size=hidden_size,
        kx_pad=kx_pad, h_pad=h_pad,
    )


# ---------------------------------------------------------------------------
# Single cell step (matches the PyTorch module's forward); no grid.
# ---------------------------------------------------------------------------

def layer_norm_rnn_cell(x, h, params):
    B = x.shape[0]
    B_pad = _round_up(max(B, 1), 16)     # bf16 packs 2 rows/sublane -> pad to 16
    ix, hh = params["input_size"], params["hidden_size"]
    kx_pad, h_pad = params["kx_pad"], params["h_pad"]

    # TODO(synk): for hot single-step use, hoist these pads to data-prep time.
    x_p = jnp.zeros((B_pad, kx_pad), jnp.bfloat16).at[:B, :ix].set(
        x.astype(jnp.bfloat16))
    h_p = jnp.zeros((B_pad, h_pad), jnp.bfloat16).at[:B, :hh].set(
        h.astype(jnp.bfloat16))

    kernel = functools.partial(_cell_kernel, h_true=hh)
    out = pl.pallas_call(
        kernel,
        out_shape=jax.ShapeDtypeStruct((B_pad, h_pad), jnp.float32),
    )(x_p, h_p, params["wxT"], params["whT"], params["gamma"], params["beta"])
    return out[:B, :hh]


# ---------------------------------------------------------------------------
# Fused multi-step recurrence: one pallas_call, time-chunked grid.
# ---------------------------------------------------------------------------

def layer_norm_rnn_scan(xs, h0, params, *, time_chunk=None):
    """xs: (T, B, input_size); h0: (B, hidden_size) -> (T, B, hidden_size)."""
    T, B, _ = xs.shape
    ix, hh = params["input_size"], params["hidden_size"]
    kx_pad, h_pad = params["kx_pad"], params["h_pad"]

    # Batch tiling: pad to 16 (packed bf16 rows); tile at 128 rows for big B so
    # the leading "parallel" axis can feed v7x's second TensorCore.
    B_pad = _round_up(max(B, 1), 16)
    if B_pad > 128:
        B_pad = _round_up(B_pad, 128)
        bt = 128
    else:
        bt = B_pad

    # Time chunking: amortize per-grid-step overhead over TC steps.
    tc = time_chunk if time_chunk is not None else min(32, T)
    tc = max(1, min(tc, T))
    T_pad = _round_up(T, tc)

    # Per-call zero-pad of the sequence. For long sequences this should be
    # done once at data-prep time (it is an extra HBM pass over xs).
    xs_p = jnp.zeros((T_pad, B_pad, kx_pad), jnp.bfloat16).at[:T, :B, :ix].set(
        xs.astype(jnp.bfloat16))
    h0_p = jnp.zeros((B_pad, h_pad), jnp.bfloat16).at[:B, :hh].set(
        h0.astype(jnp.bfloat16))

    # Explicit VMEM budget from the real block footprint (double-buffered
    # pipeline blocks + single scratch), with headroom.
    resident_bytes = (
        2 * tc * bt * kx_pad * 2      # xs blocks (bf16)
        + 2 * bt * h_pad * 2          # h0 block (bf16)
        + 2 * kx_pad * h_pad * 2      # wxT (bf16)
        + 2 * h_pad * h_pad * 2       # whT (bf16)
        + 2 * 2 * h_pad * 4           # gamma + beta (f32)
        + 2 * tc * bt * h_pad * 4     # out blocks (f32)
        + bt * h_pad * 2              # carried hidden scratch (bf16)
    )
    vmem_limit = int(min(128 * 1024 * 1024,
                         max(2 * resident_bytes, 8 * 1024 * 1024)))

    kernel = functools.partial(_scan_kernel, h_true=hh, tc=tc)
    out = pl.pallas_call(
        kernel,
        out_shape=jax.ShapeDtypeStruct((T_pad, B_pad, h_pad), jnp.float32),
        grid_spec=pltpu.PrefetchScalarGridSpec(
            num_scalar_prefetch=0,
            grid=(B_pad // bt, T_pad // tc),
            in_specs=[
                # Per-chunk x tile; weights / gamma / beta / h0 are resident
                # (same block every step => no re-DMA).
                pl.BlockSpec((tc, bt, kx_pad), lambda b, t: (t, b, 0)),
                pl.BlockSpec((bt, h_pad), lambda b, t: (b, 0)),
                pl.BlockSpec((kx_pad, h_pad), lambda b, t: (0, 0)),
                pl.BlockSpec((h_pad, h_pad), lambda b, t: (0, 0)),
                pl.BlockSpec((1, h_pad), lambda b, t: (0, 0)),
                pl.BlockSpec((1, h_pad), lambda b, t: (0, 0)),
            ],
            out_specs=pl.BlockSpec((tc, bt, h_pad), lambda b, t: (t, b, 0)),
            scratch_shapes=[pltpu.VMEM((bt, h_pad), jnp.bfloat16)],
        ),
        compiler_params=pltpu.CompilerParams(
            # batch tiles independent (megacore on v7x); time sequential.
            dimension_semantics=("parallel", "arbitrary"),
            vmem_limit_bytes=vmem_limit),
    )(xs_p, h0_p, params["wxT"], params["whT"], params["gamma"], params["beta"])
    return out[:T, :B, :hh]


# ---------------------------------------------------------------------------
# Pure-JAX references (same bf16 operand quantization as the kernel)
# ---------------------------------------------------------------------------

def _reference_cell(x, h, weight, gamma, beta):
    xb = x.astype(jnp.bfloat16).astype(jnp.float32)
    hb = h.astype(jnp.bfloat16).astype(jnp.float32)
    wb = weight.astype(jnp.bfloat16).astype(jnp.float32)
    z = jnp.concatenate([xb, hb], axis=1) @ wb.T
    mean = jnp.mean(z, axis=-1, keepdims=True)
    var = jnp.mean((z - mean) ** 2, axis=-1, keepdims=True)
    return jnp.tanh((z - mean) / jnp.sqrt(var + EPS) * gamma + beta)


def _reference_scan(xs, h0, weight, gamma, beta):
    def step(h, x):
        h_new = _reference_cell(x, h, weight, gamma, beta)
        return h_new, h_new
    _, hs = jax.lax.scan(step, h0, xs)
    return hs


if __name__ == "__main__":
    key = jax.random.PRNGKey(0)
    batch = 2
    input_size = 16
    hidden_size = 32
    seq_len = 8
    K = input_size + hidden_size

    k_x, k_h, k_w, k_seq = jax.random.split(key, 4)
    x = jax.random.normal(k_x, (batch, input_size), dtype=jnp.float32)
    h = jax.random.normal(k_h, (batch, hidden_size), dtype=jnp.float32)
    xs = jax.random.normal(k_seq, (seq_len, batch, input_size), dtype=jnp.float32)

    # nn.Linear-style U(-1/sqrt(fan_in), 1/sqrt(fan_in)) init; LN defaults.
    bound = 1.0 / jnp.sqrt(jnp.float32(K))
    weight = jax.random.uniform(
        k_w, (hidden_size, K), dtype=jnp.float32, minval=-bound, maxval=bound)
    gamma = jnp.ones((hidden_size,), dtype=jnp.float32)
    beta = jnp.zeros((hidden_size,), dtype=jnp.float32)

    params = prepare_params(weight, gamma, beta, input_size, hidden_size)

    # Single cell step (== the PyTorch module's forward).
    out_cell = jax.block_until_ready(layer_norm_rnn_cell(x, h, params))
    ref_cell = _reference_cell(x, h, weight, gamma, beta)
    assert out_cell.shape == (batch, hidden_size)
    assert jnp.allclose(out_cell, ref_cell, atol=1e-3, rtol=1e-3), \
        "cell mismatch vs reference"

    # Fused, time-chunked multi-step recurrence (repeated cell application).
    out_seq = jax.block_until_ready(layer_norm_rnn_scan(xs, h, params))
    ref_seq = _reference_scan(xs, h, weight, gamma, beta)
    assert out_seq.shape == (seq_len, batch, hidden_size)
    assert jnp.allclose(out_seq, ref_seq, atol=2e-3, rtol=2e-3), \
        "scan mismatch vs reference"

    print("KERNEL_OK")
</pallas_src>

<mosaic_0001>
module attributes {stable_mosaic.version = 11 : i64} {
  func.func @_cell_kernel(%arg0: memref<16x128xbf16, #tpu.memory_space<vmem>>, %arg1: memref<16x128xbf16, #tpu.memory_space<vmem>>, %arg2: memref<128x128xbf16, #tpu.memory_space<vmem>>, %arg3: memref<128x128xbf16, #tpu.memory_space<vmem>>, %arg4: memref<1x128xf32, #tpu.memory_space<vmem>>, %arg5: memref<1x128xf32, #tpu.memory_space<vmem>>, %arg6: memref<16x128xf32, #tpu.memory_space<vmem>>) attributes {dimension_semantics = [], scalar_prefetch = 0 : i64, scratch_operands = 0 : i64, tpu.core_type = #tpu.core_type<tc>} {
    %c0 = arith.constant 0 : index
    %c0_0 = arith.constant 0 : index
    %0 = vector.load %arg0[%c0, %c0_0] : memref<16x128xbf16, #tpu.memory_space<vmem>>, vector<16x128xbf16>
    %c0_1 = arith.constant 0 : index
    %c0_2 = arith.constant 0 : index
    %1 = vector.load %arg2[%c0_1, %c0_2] : memref<128x128xbf16, #tpu.memory_space<vmem>>, vector<128x128xbf16>
    %cst = arith.constant dense<0.000000e+00> : vector<16x128xf32>
    %2 = tpu.matmul %0, %1, %cst {dimension_numbers = #tpu.dot_dimension_numbers<[1], [0], [0], [1], [0, 0, 1, 1], [], []>} : vector<16x128xbf16>, vector<128x128xbf16>, vector<16x128xf32> -> vector<16x128xf32>
    %c0_3 = arith.constant 0 : index
    %c0_4 = arith.constant 0 : index
    %3 = vector.load %arg1[%c0_3, %c0_4] : memref<16x128xbf16, #tpu.memory_space<vmem>>, vector<16x128xbf16>
    %c0_5 = arith.constant 0 : index
    %c0_6 = arith.constant 0 : index
    %4 = vector.load %arg3[%c0_5, %c0_6] : memref<128x128xbf16, #tpu.memory_space<vmem>>, vector<128x128xbf16>
    %cst_7 = arith.constant dense<0.000000e+00> : vector<16x128xf32>
    %5 = tpu.matmul %3, %4, %cst_7 {dimension_numbers = #tpu.dot_dimension_numbers<[1], [0], [0], [1], [0, 0, 1, 1], [], []>} : vector<16x128xbf16>, vector<128x128xbf16>, vector<16x128xf32> -> vector<16x128xf32>
    %6 = arith.addf %2, %5 : vector<16x128xf32>
    %c0_8 = arith.constant 0 : index
    %c0_9 = arith.constant 0 : index
    %7 = vector.load %arg4[%c0_8, %c0_9] : memref<1x128xf32, #tpu.memory_space<vmem>>, vector<1x128xf32>
    %c0_10 = arith.constant 0 : index
    %c0_11 = arith.constant 0 : index
    %8 = vector.load %arg5[%c0_10, %c0_11] : memref<1x128xf32, #tpu.memory_space<vmem>>, vector<1x128xf32>
    %cst_12 = arith.constant dense<0.000000e+00> : vector<16xf32>
    %9 = vector.multi_reduction <add>, %6, %cst_12 [1] : vector<16x128xf32> to vector<16xf32>
    %10 = vector.shape_cast %9 : vector<16xf32> to vector<16x1xf32>
    %cst_13 = arith.constant 3.125000e-02 : f32
    %11 = vector.broadcast %cst_13 : f32 to vector<16x1xf32>
    %12 = arith.mulf %10, %11 : vector<16x1xf32>
    %13 = arith.mulf %6, %6 : vector<16x128xf32>
    %cst_14 = arith.constant dense<0.000000e+00> : vector<16xf32>
    %14 = vector.multi_reduction <add>, %13, %cst_14 [1] : vector<16x128xf32> to vector<16xf32>
    %15 = vector.shape_cast %14 : vector<16xf32> to vector<16x1xf32>
    %cst_15 = arith.constant 3.125000e-02 : f32
    %16 = vector.broadcast %cst_15 : f32 to vector<16x1xf32>
    %17 = arith.mulf %15, %16 : vector<16x1xf32>
    %18 = arith.mulf %12, %12 : vector<16x1xf32>
    %19 = arith.subf %17, %18 : vector<16x1xf32>
    %cst_16 = arith.constant 0.000000e+00 : f32
    %20 = vector.broadcast %cst_16 : f32 to vector<16x1xf32>
    %21 = arith.maximumf %19, %20 : vector<16x1xf32>
    %22 = vector.broadcast %12 : vector<16x1xf32> to vector<16x128xf32>
    %23 = arith.subf %6, %22 : vector<16x128xf32>
    %cst_17 = arith.constant 9.99999974E-6 : f32
    %24 = vector.broadcast %cst_17 : f32 to vector<16x1xf32>
    %25 = arith.addf %21, %24 : vector<16x1xf32>
    %26 = math.rsqrt %25 : vector<16x1xf32>
    %27 = vector.broadcast %26 : vector<16x1xf32> to vector<16x128xf32>
    %28 = arith.mulf %23, %27 : vector<16x128xf32>
    %29 = vector.broadcast %7 : vector<1x128xf32> to vector<16x128xf32>
    %30 = arith.mulf %28, %29 : vector<16x128xf32>
    %31 = vector.broadcast %8 : vector<1x128xf32> to vector<16x128xf32>
    %32 = arith.addf %30, %31 : vector<16x128xf32>
    %33 = math.tanh %32 : vector<16x128xf32>
    %c0_18 = arith.constant 0 : index
    %c0_19 = arith.constant 0 : index
    %34 = vector.load %arg6[%c0_18, %c0_19] : memref<16x128xf32, #tpu.memory_space<vmem>>, vector<16x128xf32>
    tpu.vector_store %arg6[%c0_18, %c0_19], %33 {strides = array<i32>} : memref<16x128xf32, #tpu.memory_space<vmem>>, vector<16x128xf32>,
    return
  }
}

</mosaic_0001>

<llo_original>
// kernel: tpu_custom_call.1
$region0: #{tpu_custom_call.1}
  #allocation0 [shape = 'u32[]', space=smem, size = 0x4, offset = 0x4, fixed_abs, tag = 'smem constant byte address 0x4 - core index']
  #allocation1 [shape = 'u32[144,128]{1,0:T(1,128)}', space=vmem, size = 0x12000, scoped, tag = 'internal scratch']
  %s0 = inlined_call_operand.hbm [shape: bf16[16,128], index: 0, kind: input, shape index: {}]
  %s1 = inlined_call_operand.hbm [shape: bf16[16,128], index: 1, kind: input, shape index: {}]
  %s2 = inlined_call_operand.hbm [shape: bf16[128,128], index: 2, kind: input, shape index: {}]
  %s3 = inlined_call_operand.hbm [shape: bf16[128,128], index: 3, kind: input, shape index: {}]
  %s4 = inlined_call_operand.vmem [shape: f32[1,128], index: 4, kind: input, shape index: {}]
  %s5 = inlined_call_operand.vmem [shape: f32[1,128], index: 5, kind: input, shape index: {}]
  %s6 = inlined_call_operand.hbm [shape: f32[16,128], index: 6, kind: output, shape index: {}]
  %s7 = sld [smem:[#allocation0]]
  $region50: #{tpu_custom_call.1} parent=0
    _
  %s9 = ssub.s32 1, %s7
  %s10 = scalar_select 0, %s9, %s7
  $region1: #{tpu_custom_call.1} parent=0
    #allocation2 [shape = 'u8[4096]{0}', space=vmem, size = 0x1000, scoped, tag = 'input window, operand 0, single buffered']
    #allocation3 [shape = 's32[1]{0}', space=sflag, size = 0x4, scoped, tag = 'scoped memory for tpu_custom_call.1']
    #allocation4 [shape = 's32[1]{0}', space=sflag, size = 0x4, scoped, tag = 'scoped memory for tpu_custom_call.1']
    #allocation5 [shape = 'u8[4096]{0}', space=vmem, size = 0x1000, scoped, tag = 'input window, operand 1, single buffered']
    #allocation6 [shape = 's32[1]{0}', space=sflag, size = 0x4, scoped, tag = 'scoped memory for tpu_custom_call.1']
    #allocation7 [shape = 'u8[32768]{0}', space=vmem, size = 0x8000, scoped, tag = 'input window, operand 2, single buffered']
    #allocation8 [shape = 'u8[32768]{0}', space=vmem, size = 0x8000, scoped, tag = 'input window, operand 3, single buffered']
    #allocation9 [shape = 's32[1]{0}', space=sflag, size = 0x4, scoped, tag = 'scoped memory for tpu_custom_call.1']
    #allocation10 [shape = 'u8[8192]{0}', space=vmem, size = 0x2000, scoped, tag = 'output window, operand 0, single buffered']
    %11 = vsyncpa [#allocation3], 0
    %12 = vsyncpa [#allocation6], 0
    %13 = vsyncpa [#allocation9], 0
    %14 = vsyncpa [#allocation4], 0
    // Predicated region
    $region2: #{tpu_custom_call.1} parent=1 // pred_check
      _
    $region3: #{tpu_custom_call.1} parent=1 // pred_check_branch
      %16 = sbr.rel (0) target = $region5
    $region4: #{tpu_custom_call.1} parent=1 // pred_region
      %s18 = ssub.s32 128, 128
      %19 = vsyncadd [#allocation3], %s18
      %s20 = sshll.u32 [#allocation2], 4
      %s21 = int_to_ptr.vmem [resolvable:$true] %s20
      %26 = dma.hbm_to_vmem [thread:$0]  %s0, 128, %s21, [#allocation3], 64, 64, 4
    $region5: #{tpu_custom_call.1} parent=1 // pred_fallthru
      _
    // Predicated region
    $region6: #{tpu_custom_call.1} parent=1 // pred_check
      _
    $region7: #{tpu_custom_call.1} parent=1 // pred_check_branch
      %28 = sbr.rel (0) target = $region9
    $region8: #{tpu_custom_call.1} parent=1 // pred_region
      %s30 = ssub.s32 128, 128
      %31 = vsyncadd [#allocation6], %s30
      %s32 = sshll.u32 [#allocation5], 4
      %s33 = int_to_ptr.vmem [resolvable:$true] %s32
      %38 = dma.hbm_to_vmem [thread:$0]  %s1, 128, %s33, [#allocation6], 64, 64, 4
    $region9: #{tpu_custom_call.1} parent=1 // pred_fallthru
      _
    // Predicated region
    $region10: #{tpu_custom_call.1} parent=1 // pred_check
      _
    $region11: #{tpu_custom_call.1} parent=1 // pred_check_branch
      %40 = sbr.rel (0) target = $region13
    $region12: #{tpu_custom_call.1} parent=1 // pred_region
      %s42 = ssub.s32 1024, 1024
      %43 = vsyncadd [#allocation6], %s42
      %s44 = sshll.u32 [#allocation7], 4
      %s45 = int_to_ptr.vmem [resolvable:$true] %s44
      %50 = dma.hbm_to_vmem [thread:$0]  %s2, 1024, %s45, [#allocation6], 64, 64, 4
    $region13: #{tpu_custom_call.1} parent=1 // pred_fallthru
      _
    // Predicated region
    $region14: #{tpu_custom_call.1} parent=1 // pred_check
      _
    $region15: #{tpu_custom_call.1} parent=1 // pred_check_branch
      %52 = sbr.rel (0) target = $region17
    $region16: #{tpu_custom_call.1} parent=1 // pred_region
      %s54 = ssub.s32 1024, 1024
      %55 = vsyncadd [#allocation9], %s54
      %s56 = sshll.u32 [#allocation8], 4
      %s57 = int_to_ptr.vmem [resolvable:$true] %s56
      %62 = dma.hbm_to_vmem [thread:$0]  %s3, 1024, %s57, [#allocation9], 64, 64, 4
    $region17: #{tpu_custom_call.1} parent=1 // pred_fallthru
      _
    // Predicated region
    $region18: #{tpu_custom_call.1} parent=1 // pred_check
      _
    $region19: #{tpu_custom_call.1} parent=1 // pred_check_branch
      %64 = sbr.rel (0) target = $region21
    $region20: #{tpu_custom_call.1} parent=1 // pred_region
      _
    $region21: #{tpu_custom_call.1} parent=1 // pred_fallthru
      _
    // Predicated region
    $region22: #{tpu_custom_call.1} parent=1 // pred_check
      _
    $region23: #{tpu_custom_call.1} parent=1 // pred_check_branch
      %66 = sbr.rel (0) target = $region25
    $region24: #{tpu_custom_call.1} parent=1 // pred_region
      _
    $region25: #{tpu_custom_call.1} parent=1 // pred_fallthru
      _
    // Predicated region
    $region26: #{tpu_custom_call.1} parent=1 // pred_check
      _
    $region27: #{tpu_custom_call.1} parent=1 // pred_check_branch
      %68 = sbr.rel (0) target = $region29
    $region28: #{tpu_custom_call.1} parent=1 // pred_region
      %69 = dma.done [#allocation3], 128
    $region29: #{tpu_custom_call.1} parent=1 // pred_fallthru
      _
    // Predicated region
    $region30: #{tpu_custom_call.1} parent=1 // pred_check
      _
    $region31: #{tpu_custom_call.1} parent=1 // pred_check_branch
      %71 = sbr.rel (0) target = $region33
    $region32: #{tpu_custom_call.1} parent=1 // pred_region
      %72 = dma.done [#allocation6], 128
    $region33: #{tpu_custom_call.1} parent=1 // pred_fallthru
      _
    // Predicated region
    $region34: #{tpu_custom_call.1} parent=1 // pred_check
      _
    $region35: #{tpu_custom_call.1} parent=1 // pred_check_branch
      %74 = sbr.rel (0) target = $region37
    $region36: #{tpu_custom_call.1} parent=1 // pred_region
      %75 = dma.done [#allocation6], 1024
    $region37: #{tpu_custom_call.1} parent=1 // pred_fallthru
      _
    // Predicated region
    $region38: #{tpu_custom_call.1} parent=1 // pred_check
      _
    $region39: #{tpu_custom_call.1} parent=1 // pred_check_branch
      %77 = sbr.rel (0) target = $region41
    $region40: #{tpu_custom_call.1} parent=1 // pred_region
      %78 = dma.done [#allocation9], 1024
    $region41: #{tpu_custom_call.1} parent=1 // pred_fallthru
      _
    %v80 = vld [vmem:[#allocation2] sm:$0xf]
    %v81 = vld [vmem:[#allocation2 + $0x4] sm:$0xf]
    %v82 = vld [vmem:[#allocation7] sm:$0xf]
    %v83 = vld [vmem:[#allocation7 + $0x4] sm:$0xf]
    %v84 = vld [vmem:[#allocation7 + $0x8] sm:$0xf]
    %v85 = vld [vmem:[#allocation7 + $0xc] sm:$0xf]
    %v86 = vld [vmem:[#allocation7 + $0x10] sm:$0xf]
    %v87 = vld [vmem:[#allocation7 + $0x14] sm:$0xf]
    %v88 = vld [vmem:[#allocation7 + $0x18] sm:$0xf]
    %v89 = vld [vmem:[#allocation7 + $0x1c] sm:$0xf]
    %v90 = vld [vmem:[#allocation7 + $0x20] sm:$0xf]
    %v91 = vld [vmem:[#allocation7 + $0x24] sm:$0xf]
    %v92 = vld [vmem:[#allocation7 + $0x28] sm:$0xf]
    %v93 = vld [vmem:[#allocation7 + $0x2c] sm:$0xf]
    %v94 = vld [vmem:[#allocation7 + $0x30] sm:$0xf]
    %v95 = vld [vmem:[#allocation7 + $0x34] sm:$0xf]
    %v96 = vld [vmem:[#allocation7 + $0x38] sm:$0xf]
    %v97 = vld [vmem:[#allocation7 + $0x3c] sm:$0xf]
    %v98 = vld [vmem:[#allocation5] sm:$0xf]
    %v99 = vld [vmem:[#allocation5 + $0x4] sm:$0xf]
    %v100 = vld [vmem:[#allocation8] sm:$0xf]
    %v101 = vld [vmem:[#allocation8 + $0x4] sm:$0xf]
    %v102 = vld [vmem:[#allocation8 + $0x8] sm:$0xf]
    %v103 = vld [vmem:[#allocation8 + $0xc] sm:$0xf]
    %v104 = vld [vmem:[#allocation8 + $0x10] sm:$0xf]
    %v105 = vld [vmem:[#allocation8 + $0x14] sm:$0xf]
    %v106 = vld [vmem:[#allocation8 + $0x18] sm:$0xf]
    %v107 = vld [vmem:[#allocation8 + $0x1c] sm:$0xf]
    %v108 = vld [vmem:[#allocation8 + $0x20] sm:$0xf]
    %v109 = vld [vmem:[#allocation8 + $0x24] sm:$0xf]
    %v110 = vld [vmem:[#allocation8 + $0x28] sm:$0xf]
    %v111 = vld [vmem:[#allocation8 + $0x2c] sm:$0xf]
    %v112 = vld [vmem:[#allocation8 + $0x30] sm:$0xf]
    %v113 = vld [vmem:[#allocation8 + $0x34] sm:$0xf]
    %v114 = vld [vmem:[#allocation8 + $0x38] sm:$0xf]
    %v115 = vld [vmem:[#allocation8 + $0x3c] sm:$0xf]
    %v118 = vunpack.c.l.b16 %v98
    %v119 = vunpack.c.l.b16 %v99
    %v120 = vpack.c.b16 %v119, %v118
    %v138 = vunpack.c.l.b16 %v100
    %v139 = vunpack.c.l.b16 %v101
    %v140 = vunpack.c.l.b16 %v102
    %v141 = vunpack.c.l.b16 %v103
    %v142 = vunpack.c.l.b16 %v104
    %v143 = vunpack.c.l.b16 %v105
    %v144 = vunpack.c.l.b16 %v106
    %v145 = vunpack.c.l.b16 %v107
    %v146 = vunpack.c.l.b16 %v108
    %v147 = vunpack.c.l.b16 %v109
    %v148 = vunpack.c.l.b16 %v110
    %v149 = vunpack.c.l.b16 %v111
    %v150 = vunpack.c.l.b16 %v112
    %v151 = vunpack.c.l.b16 %v113
    %v152 = vunpack.c.l.b16 %v114
    %v153 = vunpack.c.l.b16 %v115
    %v154 = vpack.c.b16 %v139, %v138
    %v155 = vpack.c.b16 %v141, %v140
    %v156 = vpack.c.b16 %v143, %v142
    %v157 = vpack.c.b16 %v145, %v144
    %v158 = vpack.c.b16 %v147, %v146
    %v159 = vpack.c.b16 %v149, %v148
    %v160 = vpack.c.b16 %v151, %v150
    %v161 = vpack.c.b16 %v153, %v152
    %170 = vmatprep.subr.bf16.mxu0 0
    %171 = vmatpush1.bf16.msra.mxu0 %v154
    %172 = vmatprep.subr.bf16.mxu0 0
    %173 = vmatpush1.bf16.msra.mxu0 %v155
    %174 = vmatprep.subr.bf16.mxu0 0
    %175 = vmatpush1.bf16.msra.mxu0 %v156
    %176 = vmatprep.subr.bf16.mxu0 0
    %177 = vmatpush1.bf16.msra.mxu0 %v157
    %178 = vmatprep.subr.bf16.mxu0 0
    %179 = vmatpush1.bf16.msra.mxu0 %v158
    %180 = vmatprep.subr.bf16.mxu0 0
    %181 = vmatpush1.bf16.msra.mxu0 %v159
    %182 = vmatprep.subr.bf16.mxu0 0
    %183 = vmatpush1.bf16.msra.mxu0 %v160
    %184 = vmatprep.subr.bf16.mxu0 0
    %185 = vmatpush1.bf16.msra.mxu0 %v161
    %186 = vmatprep.subr.bf16.mxu0 0
    %187 = vmatpush1.bf16.msra.mxu0 0
    %188 = vmatprep.subr.bf16.mxu0 0
    %189 = vmatpush1.bf16.msra.mxu0 0
    %190 = vmatprep.subr.bf16.mxu0 0
    %191 = vmatpush1.bf16.msra.mxu0 0
    %192 = vmatprep.subr.bf16.mxu0 0
    %193 = vmatpush1.bf16.msra.mxu0 0
    %194 = vmatprep.subr.bf16.mxu0 0
    %195 = vmatpush1.bf16.msra.mxu0 0
    %196 = vmatprep.subr.bf16.mxu0 0
    %197 = vmatpush1.bf16.msra.mxu0 0
    %198 = vmatprep.subr.bf16.mxu0 0
    %199 = vmatpush1.bf16.msra.mxu0 0
    %200 = vmatprep.subr.bf16.mxu0 0
    %201 = vmatpush1.bf16.msra.mxu0 0
    %202 = vmatprep.mubr.bf16.mxu0 0
    %203 = vmatmul.mubr.bf16.gmra.mrb[0].mxu0 %v120
    %v204 = vpop.f32.mrb[0].mxu0
    %v205 = vadd.f32 0.0, %v204
    %v206 = vpop.f32.mrb[0].mxu0
    %v207 = vpop.f32.mrb[0].mxu0
    %v208 = vadd.f32 0.0, %v207
    %v209 = vpop.f32.mrb[0].mxu0
    %210 = vdwg.mxu0
    %v213 = vunpack.c.l.b16 %v80
    %v214 = vunpack.c.l.b16 %v81
    %v215 = vpack.c.b16 %v214, %v213
    %v233 = vunpack.c.l.b16 %v82
    %v234 = vunpack.c.l.b16 %v83
    %v235 = vunpack.c.l.b16 %v84
    %v236 = vunpack.c.l.b16 %v85
    %v237 = vunpack.c.l.b16 %v86
    %v238 = vunpack.c.l.b16 %v87
    %v239 = vunpack.c.l.b16 %v88
    %v240 = vunpack.c.l.b16 %v89
    %v241 = vunpack.c.l.b16 %v90
    %v242 = vunpack.c.l.b16 %v91
    %v243 = vunpack.c.l.b16 %v92
    %v244 = vunpack.c.l.b16 %v93
    %v245 = vunpack.c.l.b16 %v94
    %v246 = vunpack.c.l.b16 %v95
    %v247 = vunpack.c.l.b16 %v96
    %v248 = vunpack.c.l.b16 %v97
    %v249 = vpack.c.b16 %v234, %v233
    %v250 = vpack.c.b16 %v236, %v235
    %v251 = vpack.c.b16 %v238, %v237
    %v252 = vpack.c.b16 %v240, %v239
    %v253 = vpack.c.b16 %v242, %v241
    %v254 = vpack.c.b16 %v244, %v243
    %v255 = vpack.c.b16 %v246, %v245
    %v256 = vpack.c.b16 %v248, %v247
    %265 = vmatprep.subr.bf16.mxu0 0
    %266 = vmatpush1.bf16.msra.mxu0 %v249
    %267 = vmatprep.subr.bf16.mxu0 0
    %268 = vmatpush1.bf16.msra.mxu0 %v250
    %269 = vmatprep.subr.bf16.mxu0 0
    %270 = vmatpush1.bf16.msra.mxu0 %v251
    %271 = vmatprep.subr.bf16.mxu0 0
    %272 = vmatpush1.bf16.msra.mxu0 %v252
    %273 = vmatprep.subr.bf16.mxu0 0
    %274 = vmatpush1.bf16.msra.mxu0 %v253
    %275 = vmatprep.subr.bf16.mxu0 0
    %276 = vmatpush1.bf16.msra.mxu0 %v254
    %277 = vmatprep.subr.bf16.mxu0 0
    %278 = vmatpush1.bf16.msra.mxu0 %v255
    %279 = vmatprep.subr.bf16.mxu0 0
    %280 = vmatpush1.bf16.msra.mxu0 %v256
    %281 = vmatprep.subr.bf16.mxu0 0
    %282 = vmatpush1.bf16.msra.mxu0 0
    %283 = vmatprep.subr.bf16.mxu0 0
    %284 = vmatpush1.bf16.msra.mxu0 0
    %285 = vmatprep.subr.bf16.mxu0 0
    %286 = vmatpush1.bf16.msra.mxu0 0
    %287 = vmatprep.subr.bf16.mxu0 0
    %288 = vmatpush1.bf16.msra.mxu0 0
    %289 = vmatprep.subr.bf16.mxu0 0
    %290 = vmatpush1.bf16.msra.mxu0 0
    %291 = vmatprep.subr.bf16.mxu0 0
    %292 = vmatpush1.bf16.msra.mxu0 0
    %293 = vmatprep.subr.bf16.mxu0 0
    %294 = vmatpush1.bf16.msra.mxu0 0
    %295 = vmatprep.subr.bf16.mxu0 0
    %296 = vmatpush1.bf16.msra.mxu0 0
    %297 = vmatprep.mubr.bf16.mxu0 0
    %298 = vmatmul.mubr.bf16.gmra.mrb[0].mxu0 %v215
    %v299 = vpop.f32.mrb[0].mxu0
    %v300 = vadd.f32 %v205, %v299
    %v301 = vpop.f32.mrb[0].mxu0
    %v302 = vpop.f32.mrb[0].mxu0
    %v303 = vadd.f32 %v208, %v302
    %v304 = vpop.f32.mrb[0].mxu0
    %305 = vdwg.mxu0
    %v306 = vld [vmem:[%s4] sm:$0x1]
    %v307 = vld [vmem:[%s5] sm:$0x1]
    %308 = vadd.xlane.f32.xlu0 %v300
    %v309 = vpop.xlane.xlu0 %308
    %310 = vadd.xlane.f32.xlu0 %v303
    %v311 = vpop.xlane.xlu0 %310
    %v312 = vmul.f32 %v309, 0.03125
    %v313 = vmul.f32 %v311, 0.03125
    %v314 = vmul.f32 %v300, %v300
    %v315 = vmul.f32 %v303, %v303
    %316 = vadd.xlane.f32.xlu0 %v314
    %v317 = vpop.xlane.xlu0 %316
    %318 = vadd.xlane.f32.xlu0 %v315
    %v319 = vpop.xlane.xlu0 %318
    %v320 = vmul.f32 %v317, 0.03125
    %v321 = vmul.f32 %v319, 0.03125
    %v322 = vmul.f32 %v312, %v312
    %v323 = vmul.f32 %v313, %v313
    %v324 = vsub.f32 %v320, %v322
    %v325 = vsub.f32 %v321, %v323
    %v326 = vmax.f32 %v324, 0.0
    %v327 = vmax.f32 %v325, 0.0
    %v328 = vsub.f32 %v300, %v312
    %v329 = vsub.f32 %v303, %v313
    %v330 = vadd.f32 %v326, 1e-05
    %v331 = vadd.f32 %v327, 1e-05
    %v332 = vrsqrt.pop %v330
    %v333 = vrsqrt.pop %v331
    %v334 = vmul.f32 %v328, %v332
    %v335 = vmul.f32 %v329, %v333
    %v337 = vlaneseq
    %v338 = vshrl.u32 %v337, 7
    %v339 = vsub.s32 0, %v338
    %v340 = vrot.slane %v306, %v339
    %v342 = vmul.f32 %v334, %v340
    %v343 = vmul.f32 %v335, %v340
    %v345 = vlaneseq
    %v346 = vshrl.u32 %v345, 7
    %v347 = vsub.s32 0, %v346
    %v348 = vrot.slane %v307, %v347
    %v350 = vadd.f32 %v342, %v348
    %v351 = vadd.f32 %v343, %v348
    %v352 = vtanh.pop %v350
    %v353 = vtanh.pop %v351
    %354 = vst [vmem:[#allocation10] sm:$0xff] %v352
    %355 = vst [vmem:[#allocation10 + $0x8] sm:$0xff] %v353
    // Predicated region
    $region42: #{tpu_custom_call.1} parent=1 // pred_check
      _
    $region43: #{tpu_custom_call.1} parent=1 // pred_check_branch
      %357 = sbr.rel (0) target = $region45
    $region44: #{tpu_custom_call.1} parent=1 // pred_region
      %s359 = ssub.s32 256, 256
      %360 = vsyncadd [#allocation4], %s359
      %s361 = sshll.u32 [#allocation10], 4
      %s362 = int_to_ptr.vmem [resolvable:$true] %s361
      %367 = dma.vmem_to_hbm [thread:$0]  %s362, 256, %s6, [#allocation4], 128, 128, 8
    $region45: #{tpu_custom_call.1} parent=1 // pred_fallthru
      _
    // Predicated region
    $region46: #{tpu_custom_call.1} parent=1 // pred_check
      _
    $region47: #{tpu_custom_call.1} parent=1 // pred_check_branch
      %369 = sbr.rel (0) target = $region49
    $region48: #{tpu_custom_call.1} parent=1 // pred_region
      %370 = dma.done [#allocation4], 256
    $region49: #{tpu_custom_call.1} parent=1 // pred_fallthru
      _
    %371 = vsyncpa [#allocation3], 1
    %372 = vsyncpa [#allocation6], 1
    %373 = vsyncpa [#allocation9], 1
    %374 = vsyncpa [#allocation4], 1

</llo_original>
